<compile_context>
chip_gen: v6e
topology: v6e:2x2x1
jax: 0.10.0
libtpu: 0.0.40
codegen_flags: <defaults>
</compile_context>

<pallas_src>
import functools

import jax
import jax.numpy as jnp
from jax import lax
from jax.experimental import pallas as pl
from jax.experimental.pallas import tpu as pltpu


# ----------------------------- helpers --------------------------------------

def _round_up(x, m):
    return ((x + m - 1) // m) * m


def _pad_to(a, shape):
    pads = [(0, t - s) for s, t in zip(a.shape, shape)]
    return jnp.pad(a, pads)


# ----------------------------- fused kernel ---------------------------------

def _fused_gcn_kernel(x0_ref, w_ref, b_ref, adj_ref, out_ref, *, nlayers,
                      inv_deg):
    """All layers in a single invocation (no grid).

    Per layer l:
        h = x @ W_l + b_l            (Linear; bf16 MXU inputs, f32 accumulate)
        y = (A @ h) * inv_deg        (aggr='add', /avg_degree, act = identity)
        x = h + y                    (residual in Net.forward)
    Output (layer_aggregation == sum) = y_0 + sum_l x_l.

    Padding safety: padded node rows of x0 and padded rows/cols of A are zero.
    Padded rows carry h == b each layer, but A's zero columns there mean no
    leakage into real rows; the wrapper slices back to [:N, :emb].
    """
    adj = adj_ref[...]                      # [Np, Np] bf16 (exact small ints)
    x0 = x0_ref[...]                        # [Np, D]  f32
    inv = jnp.float32(inv_deg)

    def linear_and_aggregate(x_f32, l):
        h = jnp.dot(x_f32.astype(jnp.bfloat16), w_ref[l],
                    preferred_element_type=jnp.float32) + b_ref[l]
        y = jnp.dot(adj, h.astype(jnp.bfloat16),
                    preferred_element_type=jnp.float32) * inv
        return h, y

    # Layer 0 contributes both y_0 and x_1 to the aggregation.
    h, y = linear_and_aggregate(x0, 0)
    x = h + y
    acc = y + x

    # Remaining layers: acc += x_l.  Short fixed trip count -> unrolled.
    def body(l, carry):
        x, acc = carry
        h, y = linear_and_aggregate(x, l)
        x = h + y
        return x, acc + x

    _, acc = lax.fori_loop(1, nlayers, body, (x, acc), unroll=True)
    out_ref[...] = acc                      # single lane-dense f32 store


# ------------------------------- Net wrapper --------------------------------

def init_net_params(key, node_feat_size, emb_size, nlayers):
    """Deterministic parameter init mirroring Net.__init__ layer shapes."""
    params = []
    in_size = node_feat_size
    for _ in range(nlayers):
        key, kw, kb = jax.random.split(key, 3)
        w = jax.random.normal(kw, (in_size, emb_size), jnp.float32) * 0.1
        b = jax.random.normal(kb, (1, emb_size), jnp.float32) * 0.01
        params.append((w, b))
        in_size = emb_size
    return params


def prepare_net_inputs(params, x, adj):
    """One-time host-side prep (pad / stack / cast).

    Hoisted out of the per-forward-call path so the extra pass over W and A is
    not re-paid every step.
    """
    N, F = x.shape
    emb = params[0][0].shape[1]
    L = len(params)

    # Lane/MXU-dense padding: feature dims AND the node axis (matmul M dim and
    # A's contraction / lane dim) to multiples of 128.
    D = max(_round_up(F, 128), _round_up(emb, 128))
    Np = _round_up(N, 128)

    x0 = _pad_to(x.astype(jnp.float32), (Np, D))
    # Keep A as exact small-integer counts in bf16; 1/avg_degree is applied as
    # an f32 scalar inside the kernel (better numerics than folding into bf16).
    adj_p = _pad_to(adj.astype(jnp.float32), (Np, Np)).astype(jnp.bfloat16)
    w_stk = jnp.stack(
        [_pad_to(w.astype(jnp.float32), (D, D)) for (w, _) in params]
    ).astype(jnp.bfloat16)                                    # [L, D, D]
    b_stk = jnp.stack(
        [_pad_to(b.reshape(1, -1).astype(jnp.float32), (1, D))
         for (_, b) in params])                               # [L, 1, D]

    meta = dict(n=N, emb=emb, nlayers=L, n_pad=Np, d_pad=D)
    return (x0, w_stk, b_stk, adj_p), meta


def net_forward_prepped(x0, w_stk, b_stk, adj_p, *, nlayers, inv_deg, n, emb):
    """Fused forward on pre-padded / pre-cast inputs (mirrors Net.forward)."""
    Np, D = x0.shape

    # VMEM budget: resident inputs/outputs + in-kernel f32 intermediates
    # (x, acc, h, y), with headroom; clamp to 64 MiB so it is valid on v7x.
    resident = (x0.size * 4 + w_stk.size * 2 + b_stk.size * 4
                + adj_p.size * 2 + Np * D * 4)
    vmem_limit = int(min(64 * 1024 * 1024,
                         max(2 * resident + 8 * Np * D * 4 + (4 << 20),
                             16 << 20)))

    vmem = pltpu.MemorySpace.VMEM
    out = pl.pallas_call(
        functools.partial(_fused_gcn_kernel, nlayers=nlayers, inv_deg=inv_deg),
        out_shape=jax.ShapeDtypeStruct((Np, D), jnp.float32),
        in_specs=[pl.BlockSpec(memory_space=vmem) for _ in range(4)],
        out_specs=pl.BlockSpec(memory_space=vmem),
        compiler_params=pltpu.CompilerParams(vmem_limit_bytes=vmem_limit),
    )(x0, w_stk, b_stk, adj_p)

    return out[:n, :emb]


def net_forward(params, x, adj, avg_degree):
    """Convenience wrapper: prep + fused kernel (prep redone per call).

    Prefer prepare_net_inputs() once + a jitted net_forward_prepped in loops.
    """
    prepped, meta = prepare_net_inputs(params, x, adj)
    return net_forward_prepped(*prepped, nlayers=meta["nlayers"],
                               inv_deg=1.0 / avg_degree,
                               n=meta["n"], emb=meta["emb"])


def net_forward_ref(params, x, adj, avg_degree):
    """Pure-JAX reference (f32) of the same reconstructed forward pass."""
    node_embeddings = []
    for i, (w, b) in enumerate(params):
        h = x @ w + b
        y = (adj @ h) / avg_degree
        if i == 0:
            node_embeddings.append(y)
        x = h + y
        node_embeddings.append(x)
    return sum(node_embeddings)


# ---------------------------------- main -------------------------------------

if __name__ == "__main__":
    key = jax.random.PRNGKey(0)

    N = 8                 # number of nodes
    node_feat_size = 4
    emb_size = 32
    nlayers = 2
    num_edges = 16
    avg_degree = 2.0

    k_x, k_src, k_dst, k_par = jax.random.split(key, 4)
    x = jax.random.normal(k_x, (N, node_feat_size), jnp.float32)
    src = jax.random.randint(k_src, (num_edges,), 0, N)
    dst = jax.random.randint(k_dst, (num_edges,), 0, N)

    # Dense adjacency for aggr='add':  A[dst, src] += 1
    adj = jnp.zeros((N, N), jnp.float32).at[dst, src].add(1.0)

    params = init_net_params(k_par, node_feat_size, emb_size, nlayers)

    # One-time prep (hoisted out of the per-call path), then a jitted forward.
    prepped, meta = prepare_net_inputs(params, x, adj)
    prepped = jax.block_until_ready(prepped)
    fwd = jax.jit(functools.partial(
        net_forward_prepped, nlayers=meta["nlayers"],
        inv_deg=1.0 / avg_degree, n=meta["n"], emb=meta["emb"]))
    out = jax.block_until_ready(fwd(*prepped))

    ref = net_forward_ref(params, x, adj, avg_degree)

    assert out.shape == (N, emb_size)
    assert jnp.all(jnp.isfinite(out))
    # bf16 MXU inputs with f32 accumulation -> loose tolerance.
    assert jnp.allclose(out, ref, atol=5e-2, rtol=5e-2), float(
        jnp.max(jnp.abs(out - ref)))
    print("KERNEL_OK")
</pallas_src>

<mosaic_0001>
module attributes {stable_mosaic.version = 11 : i64} {
  func.func @_fused_gcn_kernel(%arg0: memref<128x128xf32, #tpu.memory_space<vmem>>, %arg1: memref<2x128x128xbf16, #tpu.memory_space<vmem>>, %arg2: memref<2x1x128xf32, #tpu.memory_space<vmem>>, %arg3: memref<128x128xbf16, #tpu.memory_space<vmem>>, %arg4: memref<128x128xf32, #tpu.memory_space<vmem>>) attributes {dimension_semantics = [], scalar_prefetch = 0 : i64, scratch_operands = 0 : i64, tpu.core_type = #tpu.core_type<tc>} {
    %c0 = arith.constant 0 : index
    %c0_0 = arith.constant 0 : index
    %0 = vector.load %arg3[%c0, %c0_0] : memref<128x128xbf16, #tpu.memory_space<vmem>>, vector<128x128xbf16>
    %c0_1 = arith.constant 0 : index
    %c0_2 = arith.constant 0 : index
    %1 = vector.load %arg0[%c0_1, %c0_2] : memref<128x128xf32, #tpu.memory_space<vmem>>, vector<128x128xf32>
    %2 = arith.truncf %1 : vector<128x128xf32> to vector<128x128xbf16>
    %c0_3 = arith.constant 0 : index
    %c0_4 = arith.constant 0 : index
    %c0_5 = arith.constant 0 : index
    %3 = vector.load %arg1[%c0_3, %c0_4, %c0_5] : memref<2x128x128xbf16, #tpu.memory_space<vmem>>, vector<1x128x128xbf16>
    %4 = vector.shape_cast %3 : vector<1x128x128xbf16> to vector<128x128xbf16>
    %cst = arith.constant dense<0.000000e+00> : vector<128x128xf32>
    %5 = tpu.matmul %2, %4, %cst {dimension_numbers = #tpu.dot_dimension_numbers<[1], [0], [0], [1], [0, 0, 1, 1], [], []>} : vector<128x128xbf16>, vector<128x128xbf16>, vector<128x128xf32> -> vector<128x128xf32>
    %c0_6 = arith.constant 0 : index
    %c0_7 = arith.constant 0 : index
    %c0_8 = arith.constant 0 : index
    %6 = vector.load %arg2[%c0_6, %c0_7, %c0_8] : memref<2x1x128xf32, #tpu.memory_space<vmem>>, vector<1x1x128xf32>
    %7 = vector.shape_cast %6 : vector<1x1x128xf32> to vector<1x128xf32>
    %8 = vector.broadcast %7 : vector<1x128xf32> to vector<128x128xf32>
    %9 = arith.addf %5, %8 : vector<128x128xf32>
    %10 = arith.truncf %9 : vector<128x128xf32> to vector<128x128xbf16>
    %cst_9 = arith.constant dense<0.000000e+00> : vector<128x128xf32>
    %11 = tpu.matmul %0, %10, %cst_9 {dimension_numbers = #tpu.dot_dimension_numbers<[1], [0], [0], [1], [0, 0, 1, 1], [], []>} : vector<128x128xbf16>, vector<128x128xbf16>, vector<128x128xf32> -> vector<128x128xf32>
    %cst_10 = arith.constant 5.000000e-01 : f32
    %12 = vector.broadcast %cst_10 : f32 to vector<128x128xf32>
    %13 = arith.mulf %11, %12 : vector<128x128xf32>
    %14 = arith.addf %9, %13 : vector<128x128xf32>
    %15 = arith.addf %13, %14 : vector<128x128xf32>
    %cst_11 = arith.constant 5.000000e-01 : f32
    %c1_i32 = arith.constant 1 : i32
    %16 = arith.truncf %14 : vector<128x128xf32> to vector<128x128xbf16>
    %17 = arith.index_cast %c1_i32 : i32 to index
    %c0_12 = arith.constant 0 : index
    %c0_13 = arith.constant 0 : index
    %18 = vector.load %arg1[%17, %c0_12, %c0_13] : memref<2x128x128xbf16, #tpu.memory_space<vmem>>, vector<1x128x128xbf16>
    %19 = vector.shape_cast %18 : vector<1x128x128xbf16> to vector<128x128xbf16>
    %cst_14 = arith.constant dense<0.000000e+00> : vector<128x128xf32>
    %20 = tpu.matmul %16, %19, %cst_14 {dimension_numbers = #tpu.dot_dimension_numbers<[1], [0], [0], [1], [0, 0, 1, 1], [], []>} : vector<128x128xbf16>, vector<128x128xbf16>, vector<128x128xf32> -> vector<128x128xf32>
    %21 = arith.index_cast %c1_i32 : i32 to index
    %c0_15 = arith.constant 0 : index
    %c0_16 = arith.constant 0 : index
    %22 = vector.load %arg2[%21, %c0_15, %c0_16] : memref<2x1x128xf32, #tpu.memory_space<vmem>>, vector<1x1x128xf32>
    %23 = vector.shape_cast %22 : vector<1x1x128xf32> to vector<1x128xf32>
    %24 = vector.broadcast %23 : vector<1x128xf32> to vector<128x128xf32>
    %25 = arith.addf %20, %24 : vector<128x128xf32>
    %26 = arith.truncf %25 : vector<128x128xf32> to vector<128x128xbf16>
    %cst_17 = arith.constant dense<0.000000e+00> : vector<128x128xf32>
    %27 = tpu.matmul %0, %26, %cst_17 {dimension_numbers = #tpu.dot_dimension_numbers<[1], [0], [0], [1], [0, 0, 1, 1], [], []>} : vector<128x128xbf16>, vector<128x128xbf16>, vector<128x128xf32> -> vector<128x128xf32>
    %28 = vector.broadcast %cst_11 : f32 to vector<128x128xf32>
    %29 = arith.mulf %27, %28 : vector<128x128xf32>
    %30 = arith.addf %25, %29 : vector<128x128xf32>
    %31 = arith.addf %15, %30 : vector<128x128xf32>
    %c1_i32_18 = arith.constant 1 : i32
    %c0_19 = arith.constant 0 : index
    %c0_20 = arith.constant 0 : index
    %32 = vector.load %arg4[%c0_19, %c0_20] : memref<128x128xf32, #tpu.memory_space<vmem>>, vector<128x128xf32>
    tpu.vector_store %arg4[%c0_19, %c0_20], %31 {strides = array<i32>} : memref<128x128xf32, #tpu.memory_space<vmem>>, vector<128x128xf32>,
    return
  }
}

</mosaic_0001>

<llo_original>
// kernel: net_forward_prepped.1
$region0: #{net_forward_prepped.1}
  #allocation0 [shape = 'u32[]', space=smem, size = 0x4, offset = 0x4, fixed_abs, tag = 'smem constant byte address 0x4 - core index']
  #allocation1 [shape = 'u32[144,128]{1,0:T(1,128)}', space=vmem, size = 0x12000, scoped, tag = 'internal scratch']
  %s0 = inlined_call_operand.hbm [shape: f32[128,128], index: 0, kind: input, shape index: {}]
  %s1 = inlined_call_operand.hbm [shape: bf16[2,128,128], index: 1, kind: input, shape index: {}]
  %s2 = inlined_call_operand.vmem [shape: f32[2,1,128], index: 2, kind: input, shape index: {}]
  %s3 = inlined_call_operand.hbm [shape: bf16[128,128], index: 3, kind: input, shape index: {}]
  %s4 = inlined_call_operand.vmem [shape: f32[128,128], index: 4, kind: output, shape index: {}]
  %s5 = sld [smem:[#allocation0]]
  $region38: #{net_forward_prepped.1} parent=0
    _
  %s7 = ssub.s32 1, %s5
  %s8 = scalar_select 0, %s7, %s5
  $region1: #{net_forward_prepped.1} parent=0
    #allocation2 [shape = 'u8[65536]{0}', space=vmem, size = 0x10000, scoped, tag = 'input window, operand 0, single buffered']
    #allocation3 [shape = 's32[1]{0}', space=sflag, size = 0x4, scoped, tag = 'scoped memory for net_forward_prepped.1']
    #allocation4 [shape = 'u8[65536]{0}', space=vmem, size = 0x10000, scoped, tag = 'input window, operand 1, single buffered']
    #allocation5 [shape = 's32[1]{0}', space=sflag, size = 0x4, scoped, tag = 'scoped memory for net_forward_prepped.1']
    #allocation6 [shape = 'u8[32768]{0}', space=vmem, size = 0x8000, scoped, tag = 'input window, operand 3, single buffered']
    %9 = vsyncpa [#allocation3], 0
    %10 = vsyncpa [#allocation5], 0
    // Predicated region
    $region2: #{net_forward_prepped.1} parent=1 // pred_check
      _
    $region3: #{net_forward_prepped.1} parent=1 // pred_check_branch
      %12 = sbr.rel (0) target = $region5
    $region4: #{net_forward_prepped.1} parent=1 // pred_region
      %s14 = ssub.s32 2048, 2048
      %15 = vsyncadd [#allocation3], %s14
      %s16 = sshll.u32 [#allocation2], 4
      %s17 = int_to_ptr.vmem [resolvable:$true] %s16
      %22 = dma.hbm_to_vmem [thread:$0]  %s0, 2048, %s17, [#allocation3], 128, 128, 8
    $region5: #{net_forward_prepped.1} parent=1 // pred_fallthru
      _
    // Predicated region
    $region6: #{net_forward_prepped.1} parent=1 // pred_check
      _
    $region7: #{net_forward_prepped.1} parent=1 // pred_check_branch
      %24 = sbr.rel (0) target = $region9
    $region8: #{net_forward_prepped.1} parent=1 // pred_region
      %s26 = ssub.s32 2048, 2048
      %27 = vsyncadd [#allocation5], %s26
      %s28 = sshll.u32 [#allocation4], 4
      %s29 = int_to_ptr.vmem [resolvable:$true] %s28
      %34 = dma.hbm_to_vmem [thread:$0]  %s1, 2048, %s29, [#allocation5], 64, 64, 4
    $region9: #{net_forward_prepped.1} parent=1 // pred_fallthru
      _
    // Predicated region
    $region10: #{net_forward_prepped.1} parent=1 // pred_check
      _
    $region11: #{net_forward_prepped.1} parent=1 // pred_check_branch
      %36 = sbr.rel (0) target = $region13
    $region12: #{net_forward_prepped.1} parent=1 // pred_region
      _
    $region13: #{net_forward_prepped.1} parent=1 // pred_fallthru
      _
    // Predicated region
    $region14: #{net_forward_prepped.1} parent=1 // pred_check
      _
    $region15: #{net_forward_prepped.1} parent=1 // pred_check_branch
      %38 = sbr.rel (0) target = $region17
    $region16: #{net_forward_prepped.1} parent=1 // pred_region
      %s40 = ssub.s32 1024, 1024
      %41 = vsyncadd [#allocation5], %s40
      %s42 = sshll.u32 [#allocation6], 4
      %s43 = int_to_ptr.vmem [resolvable:$true] %s42
      %48 = dma.hbm_to_vmem [thread:$0]  %s3, 1024, %s43, [#allocation5], 64, 64, 4
    $region17: #{net_forward_prepped.1} parent=1 // pred_fallthru
      _
    // Predicated region
    $region18: #{net_forward_prepped.1} parent=1 // pred_check
      _
    $region19: #{net_forward_prepped.1} parent=1 // pred_check_branch
      %50 = sbr.rel (0) target = $region21
    $region20: #{net_forward_prepped.1} parent=1 // pred_region
      %51 = dma.done [#allocation3], 2048
    $region21: #{net_forward_prepped.1} parent=1 // pred_fallthru
      _
    // Predicated region
    $region22: #{net_forward_prepped.1} parent=1 // pred_check
      _
    $region23: #{net_forward_prepped.1} parent=1 // pred_check_branch
      %53 = sbr.rel (0) target = $region25
    $region24: #{net_forward_prepped.1} parent=1 // pred_region
      %54 = dma.done [#allocation5], 2048
    $region25: #{net_forward_prepped.1} parent=1 // pred_fallthru
      _
    // Predicated region
    $region26: #{net_forward_prepped.1} parent=1 // pred_check
      _
    $region27: #{net_forward_prepped.1} parent=1 // pred_check_branch
      %56 = sbr.rel (0) target = $region29
    $region28: #{net_forward_prepped.1} parent=1 // pred_region
      %57 = dma.done [#allocation5], 1024
    $region29: #{net_forward_prepped.1} parent=1 // pred_fallthru
      _
    %v59 = vld [vmem:[#allocation6] sm:$0xf]
    %v60 = vld [vmem:[#allocation6 + $0x4] sm:$0xf]
    %v61 = vld [vmem:[#allocation6 + $0x8] sm:$0xf]
    %v62 = vld [vmem:[#allocation6 + $0xc] sm:$0xf]
    %v63 = vld [vmem:[#allocation6 + $0x10] sm:$0xf]
    %v64 = vld [vmem:[#allocation6 + $0x14] sm:$0xf]
    %v65 = vld [vmem:[#allocation6 + $0x18] sm:$0xf]
    %v66 = vld [vmem:[#allocation6 + $0x1c] sm:$0xf]
    %v67 = vld [vmem:[#allocation6 + $0x20] sm:$0xf]
    %v68 = vld [vmem:[#allocation6 + $0x24] sm:$0xf]
    %v69 = vld [vmem:[#allocation6 + $0x28] sm:$0xf]
    %v70 = vld [vmem:[#allocation6 + $0x2c] sm:$0xf]
    %v71 = vld [vmem:[#allocation6 + $0x30] sm:$0xf]
    %v72 = vld [vmem:[#allocation6 + $0x34] sm:$0xf]
    %v73 = vld [vmem:[#allocation6 + $0x38] sm:$0xf]
    %v74 = vld [vmem:[#allocation6 + $0x3c] sm:$0xf]
    %v75 = vld [vmem:[#allocation2] sm:$0xff]
    %v76 = vld [vmem:[#allocation2 + $0x8] sm:$0xff]
    %v77 = vld [vmem:[#allocation2 + $0x10] sm:$0xff]
    %v78 = vld [vmem:[#allocation2 + $0x18] sm:$0xff]
    %v79 = vld [vmem:[#allocation2 + $0x20] sm:$0xff]
    %v80 = vld [vmem:[#allocation2 + $0x28] sm:$0xff]
    %v81 = vld [vmem:[#allocation2 + $0x30] sm:$0xff]
    %v82 = vld [vmem:[#allocation2 + $0x38] sm:$0xff]
    %v83 = vld [vmem:[#allocation2 + $0x40] sm:$0xff]
    %v84 = vld [vmem:[#allocation2 + $0x48] sm:$0xff]
    %v85 = vld [vmem:[#allocation2 + $0x50] sm:$0xff]
    %v86 = vld [vmem:[#allocation2 + $0x58] sm:$0xff]
    %v87 = vld [vmem:[#allocation2 + $0x60] sm:$0xff]
    %v88 = vld [vmem:[#allocation2 + $0x68] sm:$0xff]
    %v89 = vld [vmem:[#allocation2 + $0x70] sm:$0xff]
    %v90 = vld [vmem:[#allocation2 + $0x78] sm:$0xff]
    %v91 = vpack.c.bf16 %v76, %v75
    %v92 = vpack.c.bf16 %v78, %v77
    %v93 = vpack.c.bf16 %v80, %v79
    %v94 = vpack.c.bf16 %v82, %v81
    %v95 = vpack.c.bf16 %v84, %v83
    %v96 = vpack.c.bf16 %v86, %v85
    %v97 = vpack.c.bf16 %v88, %v87
    %v98 = vpack.c.bf16 %v90, %v89
    %v99 = vld [vmem:[#allocation4] sm:$0xf]
    %v100 = vld [vmem:[#allocation4 + $0x4] sm:$0xf]
    %v101 = vld [vmem:[#allocation4 + $0x8] sm:$0xf]
    %v102 = vld [vmem:[#allocation4 + $0xc] sm:$0xf]
    %v103 = vld [vmem:[#allocation4 + $0x10] sm:$0xf]
    %v104 = vld [vmem:[#allocation4 + $0x14] sm:$0xf]
    %v105 = vld [vmem:[#allocation4 + $0x18] sm:$0xf]
    %v106 = vld [vmem:[#allocation4 + $0x1c] sm:$0xf]
    %v107 = vld [vmem:[#allocation4 + $0x20] sm:$0xf]
    %v108 = vld [vmem:[#allocation4 + $0x24] sm:$0xf]
    %v109 = vld [vmem:[#allocation4 + $0x28] sm:$0xf]
    %v110 = vld [vmem:[#allocation4 + $0x2c] sm:$0xf]
    %v111 = vld [vmem:[#allocation4 + $0x30] sm:$0xf]
    %v112 = vld [vmem:[#allocation4 + $0x34] sm:$0xf]
    %v113 = vld [vmem:[#allocation4 + $0x38] sm:$0xf]
    %v114 = vld [vmem:[#allocation4 + $0x3c] sm:$0xf]
    %v115 = vld [vmem:[%s2] sm:$0x1]
    %v117 = vlaneseq
    %v118 = vshrl.u32 %v117, 7
    %v119 = vsub.s32 0, %v118
    %v120 = vrot.slane %v115, %v119
    %v138 = vunpack.c.l.b16 %v99
    %v139 = vunpack.c.l.b16 %v100
    %v140 = vunpack.c.l.b16 %v101
    %v141 = vunpack.c.l.b16 %v102
    %v142 = vunpack.c.l.b16 %v103
    %v143 = vunpack.c.l.b16 %v104
    %v144 = vunpack.c.l.b16 %v105
    %v145 = vunpack.c.l.b16 %v106
    %v146 = vunpack.c.l.b16 %v107
    %v147 = vunpack.c.l.b16 %v108
    %v148 = vunpack.c.l.b16 %v109
    %v149 = vunpack.c.l.b16 %v110
    %v150 = vunpack.c.l.b16 %v111
    %v151 = vunpack.c.l.b16 %v112
    %v152 = vunpack.c.l.b16 %v113
    %v153 = vunpack.c.l.b16 %v114
    %v154 = vpack.c.b16 %v139, %v138
    %v155 = vpack.c.b16 %v141, %v140
    %v156 = vpack.c.b16 %v143, %v142
    %v157 = vpack.c.b16 %v145, %v144
    %v158 = vpack.c.b16 %v147, %v146
    %v159 = vpack.c.b16 %v149, %v148
    %v160 = vpack.c.b16 %v151, %v150
    %v161 = vpack.c.b16 %v153, %v152
    %170 = vmatprep.subr.bf16.mxu0 0
    %171 = vmatpush1.bf16.msra.mxu0 %v161
    %172 = vmatprep.subr.bf16.mxu0 0
    %173 = vmatpush1.bf16.msra.mxu0 %v160
    %174 = vmatprep.subr.bf16.mxu0 0
    %175 = vmatpush1.bf16.msra.mxu0 %v159
    %176 = vmatprep.subr.bf16.mxu0 0
    %177 = vmatpush1.bf16.msra.mxu0 %v158
    %178 = vmatprep.subr.bf16.mxu0 0
    %179 = vmatpush1.bf16.msra.mxu0 %v157
    %180 = vmatprep.subr.bf16.mxu0 0
    %181 = vmatpush1.bf16.msra.mxu0 %v156
    %182 = vmatprep.subr.bf16.mxu0 0
    %183 = vmatpush1.bf16.msra.mxu0 %v155
    %184 = vmatprep.subr.bf16.mxu0 0
    %185 = vmatpush1.bf16.msra.mxu0 %v154
    %186 = vmatprep.subr.bf16.mxu0 0
    %187 = vmatpush2.bf16.msra.mxu0 0
    %188 = vmatprep.subr.bf16.mxu0 0
    %189 = vmatpush2.bf16.msra.mxu0 0
    %190 = vmatprep.subr.bf16.mxu0 0
    %191 = vmatpush2.bf16.msra.mxu0 0
    %192 = vmatprep.subr.bf16.mxu0 0
    %193 = vmatpush2.bf16.msra.mxu0 0
    %194 = vmatprep.subr.bf16.mxu0 0
    %195 = vmatpush2.bf16.msra.mxu0 0
    %196 = vmatprep.subr.bf16.mxu0 0
    %197 = vmatpush2.bf16.msra.mxu0 0
    %198 = vmatprep.subr.bf16.mxu0 0
    %199 = vmatpush2.bf16.msra.mxu0 0
    %200 = vmatprep.subr.bf16.mxu0 0
    %201 = vmatpush2.bf16.msra.mxu0 0
    %202 = vmatprep.mubr.bf16.mxu0 0
    %203 = vmatmul.mubr.bf16.gmra.mxu0 %v91
    %v204 = vpop.f32.mrf.mxu0
    %v205 = vadd.f32 %v120, %v204
    %v206 = vpop.f32.mrf.mxu0
    %v207 = vpop.f32.mrf.mxu0
    %v208 = vadd.f32 %v120, %v207
    %v209 = vpop.f32.mrf.mxu0
    %210 = vmatprep.mubr.bf16.mxu0 0
    %211 = vmatmul.mubr.bf16.gmra.mxu0 %v92
    %v212 = vpop.f32.mrf.mxu0
    %v213 = vadd.f32 %v120, %v212
    %v214 = vpop.f32.mrf.mxu0
    %v215 = vpop.f32.mrf.mxu0
    %v216 = vadd.f32 %v120, %v215
    %v217 = vpop.f32.mrf.mxu0
    %218 = vmatprep.mubr.bf16.mxu0 0
    %219 = vmatmul.mubr.bf16.gmra.mxu0 %v93
    %v220 = vpop.f32.mrf.mxu0
    %v221 = vadd.f32 %v120, %v220
    %v222 = vpop.f32.mrf.mxu0
    %v223 = vpop.f32.mrf.mxu0
    %v224 = vadd.f32 %v120, %v223
    %v225 = vpop.f32.mrf.mxu0
    %226 = vmatprep.mubr.bf16.mxu0 0
    %227 = vmatmul.mubr.bf16.gmra.mxu0 %v94
    %v228 = vpop.f32.mrf.mxu0
    %v229 = vadd.f32 %v120, %v228
    %v230 = vpop.f32.mrf.mxu0
    %v231 = vpop.f32.mrf.mxu0
    %v232 = vadd.f32 %v120, %v231
    %v233 = vpop.f32.mrf.mxu0
    %234 = vmatprep.mubr.bf16.mxu0 0
    %235 = vmatmul.mubr.bf16.gmra.mxu0 %v95
    %v236 = vpop.f32.mrf.mxu0
    %v237 = vadd.f32 %v120, %v236
    %v238 = vpop.f32.mrf.mxu0
    %v239 = vpop.f32.mrf.mxu0
    %v240 = vadd.f32 %v120, %v239
    %v241 = vpop.f32.mrf.mxu0
    %242 = vmatprep.mubr.bf16.mxu0 0
    %243 = vmatmul.mubr.bf16.gmra.mxu0 %v96
    %v244 = vpop.f32.mrf.mxu0
    %v245 = vadd.f32 %v120, %v244
    %v246 = vpop.f32.mrf.mxu0
    %v247 = vpop.f32.mrf.mxu0
    %v248 = vadd.f32 %v120, %v247
    %v249 = vpop.f32.mrf.mxu0
    %250 = vmatprep.mubr.bf16.mxu0 0
    %251 = vmatmul.mubr.bf16.gmra.mxu0 %v97
    %v252 = vpop.f32.mrf.mxu0
    %v253 = vadd.f32 %v120, %v252
    %v254 = vpop.f32.mrf.mxu0
    %v255 = vpop.f32.mrf.mxu0
    %v256 = vadd.f32 %v120, %v255
    %v257 = vpop.f32.mrf.mxu0
    %258 = vmatprep.mubr.bf16.mxu0 0
    %259 = vmatmul.mubr.bf16.gmra.mxu0 %v98
    %v260 = vpop.f32.mrf.mxu0
    %v261 = vadd.f32 %v120, %v260
    %v262 = vpop.f32.mrf.mxu0
    %v263 = vpop.f32.mrf.mxu0
    %v264 = vadd.f32 %v120, %v263
    %v265 = vpop.f32.mrf.mxu0
    %266 = vdwg.mxu0
    %v267 = vpack.c.bf16 %v208, %v205
    %v268 = vpack.c.bf16 %v216, %v213
    %v269 = vpack.c.bf16 %v224, %v221
    %v270 = vpack.c.bf16 %v232, %v229
    %v271 = vpack.c.bf16 %v240, %v237
    %v272 = vpack.c.bf16 %v248, %v245
    %v273 = vpack.c.bf16 %v256, %v253
    %v274 = vpack.c.bf16 %v264, %v261
    %v291 = vunpack.c.l.b16 %v59
    %v292 = vunpack.c.l.b16 %v60
    %v293 = vunpack.c.l.b16 %v61
    %v294 = vunpack.c.l.b16 %v62
    %v295 = vunpack.c.l.b16 %v63
    %v296 = vunpack.c.l.b16 %v64
    %v297 = vunpack.c.l.b16 %v65
    %v298 = vunpack.c.l.b16 %v66
    %v299 = vunpack.c.l.b16 %v67
    %v300 = vunpack.c.l.b16 %v68
    %v301 = vunpack.c.l.b16 %v69
    %v302 = vunpack.c.l.b16 %v70
    %v303 = vunpack.c.l.b16 %v71
    %v304 = vunpack.c.l.b16 %v72
    %v305 = vunpack.c.l.b16 %v73
    %v306 = vunpack.c.l.b16 %v74
    %v307 = vpack.c.b16 %v292, %v291
    %v308 = vpack.c.b16 %v294, %v293
    %v309 = vpack.c.b16 %v296, %v295
    %v310 = vpack.c.b16 %v298, %v297
    %v311 = vpack.c.b16 %v300, %v299
    %v312 = vpack.c.b16 %v302, %v301
    %v313 = vpack.c.b16 %v304, %v303
    %v314 = vpack.c.b16 %v306, %v305
    %323 = vmatprep.subr.bf16.mxu0 0
    %324 = vmatpush1.bf16.msra.mxu0 %v274
    %325 = vmatprep.subr.bf16.mxu0 0
    %326 = vmatpush1.bf16.msra.mxu0 %v273
    %327 = vmatprep.subr.bf16.mxu0 0
    %328 = vmatpush1.bf16.msra.mxu0 %v272
    %329 = vmatprep.subr.bf16.mxu0 0
    %330 = vmatpush1.bf16.msra.mxu0 %v271
    %331 = vmatprep.subr.bf16.mxu0 0
    %332 = vmatpush1.bf16.msra.mxu0 %v270
    %333 = vmatprep.subr.bf16.mxu0 0
    %334 = vmatpush1.bf16.msra.mxu0 %v269
    %335 = vmatprep.subr.bf16.mxu0 0
    %336 = vmatpush1.bf16.msra.mxu0 %v268
    %337 = vmatprep.subr.bf16.mxu0 0
    %338 = vmatpush1.bf16.msra.mxu0 %v267
    %339 = vmatprep.subr.bf16.mxu0 0
    %340 = vmatpush2.bf16.msra.mxu0 0
    %341 = vmatprep.subr.bf16.mxu0 0
    %342 = vmatpush2.bf16.msra.mxu0 0
    %343 = vmatprep.subr.bf16.mxu0 0
    %344 = vmatpush2.bf16.msra.mxu0 0
    %345 = vmatprep.subr.bf16.mxu0 0
    %346 = vmatpush2.bf16.msra.mxu0 0
    %347 = vmatprep.subr.bf16.mxu0 0
    %348 = vmatpush2.bf16.msra.mxu0 0
    %349 = vmatprep.subr.bf16.mxu0 0
    %350 = vmatpush2.bf16.msra.mxu0 0
    %351 = vmatprep.subr.bf16.mxu0 0
    %352 = vmatpush2.bf16.msra.mxu0 0
    %353 = vmatprep.subr.bf16.mxu0 0
    %354 = vmatpush2.bf16.msra.mxu0 0
    %355 = vmatprep.mubr.bf16.mxu0 0
    %356 = vmatmul.mubr.bf16.gmra.mxu0 %v307
    %v357 = vpop.f32.mrf.mxu0
    %v358 = vadd.f32 0.0, %v357
    %v359 = vpop.f32.mrf.mxu0
    %v360 = vpop.f32.mrf.mxu0
    %v361 = vadd.f32 0.0, %v360
    %v362 = vpop.f32.mrf.mxu0
    %363 = vmatprep.mubr.bf16.mxu0 0
    %364 = vmatmul.mubr.bf16.gmra.mxu0 %v308
    %v365 = vpop.f32.mrf.mxu0
    %v366 = vadd.f32 0.0, %v365
    %v367 = vpop.f32.mrf.mxu0
    %v368 = vpop.f32.mrf.mxu0
    %v369 = vadd.f32 0.0, %v368
    %v370 = vpop.f32.mrf.mxu0
    %371 = vmatprep.mubr.bf16.mxu0 0
    %372 = vmatmul.mubr.bf16.gmra.mxu0 %v309
    %v373 = vpop.f32.mrf.mxu0
    %v374 = vadd.f32 0.0, %v373
    %v375 = vpop.f32.mrf.mxu0
    %v376 = vpop.f32.mrf.mxu0
    %v377 = vadd.f32 0.0, %v376
    %v378 = vpop.f32.mrf.mxu0
    %379 = vmatprep.mubr.bf16.mxu0 0
    %380 = vmatmul.mubr.bf16.gmra.mxu0 %v310
    %v381 = vpop.f32.mrf.mxu0
    %v382 = vadd.f32 0.0, %v381
    %v383 = vpop.f32.mrf.mxu0
    %v384 = vpop.f32.mrf.mxu0
    %v385 = vadd.f32 0.0, %v384
    %v386 = vpop.f32.mrf.mxu0
    %387 = vmatprep.mubr.bf16.mxu0 0
    %388 = vmatmul.mubr.bf16.gmra.mxu0 %v311
    %v389 = vpop.f32.mrf.mxu0
    %v390 = vadd.f32 0.0, %v389
    %v391 = vpop.f32.mrf.mxu0
    %v392 = vpop.f32.mrf.mxu0
    %v393 = vadd.f32 0.0, %v392
    %v394 = vpop.f32.mrf.mxu0
    %395 = vmatprep.mubr.bf16.mxu0 0
    %396 = vmatmul.mubr.bf16.gmra.mxu0 %v312
    %v397 = vpop.f32.mrf.mxu0
    %v398 = vadd.f32 0.0, %v397
    %v399 = vpop.f32.mrf.mxu0
    %v400 = vpop.f32.mrf.mxu0
    %v401 = vadd.f32 0.0, %v400
    %v402 = vpop.f32.mrf.mxu0
    %403 = vmatprep.mubr.bf16.mxu0 0
    %404 = vmatmul.mubr.bf16.gmra.mxu0 %v313
    %v405 = vpop.f32.mrf.mxu0
    %v406 = vadd.f32 0.0, %v405
    %v407 = vpop.f32.mrf.mxu0
    %v408 = vpop.f32.mrf.mxu0
    %v409 = vadd.f32 0.0, %v408
    %v410 = vpop.f32.mrf.mxu0
    %411 = vmatprep.mubr.bf16.mxu0 0
    %412 = vmatmul.mubr.bf16.gmra.mxu0 %v314
    %v413 = vpop.f32.mrf.mxu0
    %v414 = vadd.f32 0.0, %v413
    %v415 = vpop.f32.mrf.mxu0
    %v416 = vpop.f32.mrf.mxu0
    %v417 = vadd.f32 0.0, %v416
    %v418 = vpop.f32.mrf.mxu0
    %419 = vdwg.mxu0
    %v420 = vmul.f32 %v358, 0.5
    %v421 = vmul.f32 %v361, 0.5
    %v422 = vmul.f32 %v366, 0.5
    %v423 = vmul.f32 %v369, 0.5
    %v424 = vmul.f32 %v374, 0.5
    %v425 = vmul.f32 %v377, 0.5
    %v426 = vmul.f32 %v382, 0.5
    %v427 = vmul.f32 %v385, 0.5
    %v428 = vmul.f32 %v390, 0.5
    %v429 = vmul.f32 %v393, 0.5
    %v430 = vmul.f32 %v398, 0.5
    %v431 = vmul.f32 %v401, 0.5
    %v432 = vmul.f32 %v406, 0.5
    %v433 = vmul.f32 %v409, 0.5
    %v434 = vmul.f32 %v414, 0.5
    %v435 = vmul.f32 %v417, 0.5
    %v436 = vadd.f32 %v205, %v420
    %v437 = vadd.f32 %v208, %v421
    %v438 = vadd.f32 %v213, %v422
    %v439 = vadd.f32 %v216, %v423
    %v440 = vadd.f32 %v221, %v424
    %v441 = vadd.f32 %v224, %v425
    %v442 = vadd.f32 %v229, %v426
    %v443 = vadd.f32 %v232, %v427
    %v444 = vadd.f32 %v237, %v428
    %v445 = vadd.f32 %v240, %v429
    %v446 = vadd.f32 %v245, %v430
    %v447 = vadd.f32 %v248, %v431
    %v448 = vadd.f32 %v253, %v432
    %v449 = vadd.f32 %v256, %v433
    %v450 = vadd.f32 %v261, %v434
    %v451 = vadd.f32 %v264, %v435
    %v452 = vadd.f32 %v420, %v436
    %v453 = vadd.f32 %v421, %v437
    %v454 = vadd.f32 %v422, %v438
    %v455 = vadd.f32 %v423, %v439
    %v456 = vadd.f32 %v424, %v440
    %v457 = vadd.f32 %v425, %v441
    %v458 = vadd.f32 %v426, %v442
    %v459 = vadd.f32 %v427, %v443
    %v460 = vadd.f32 %v428, %v444
    %v461 = vadd.f32 %v429, %v445
    %v462 = vadd.f32 %v430, %v446
    %v463 = vadd.f32 %v431, %v447
    %v464 = vadd.f32 %v432, %v448
    %v465 = vadd.f32 %v433, %v449
    %v466 = vadd.f32 %v434, %v450
    %v467 = vadd.f32 %v435, %v451
    %v468 = vpack.c.bf16 %v437, %v436
    %v469 = vpack.c.bf16 %v439, %v438
    %v470 = vpack.c.bf16 %v441, %v440
    %v471 = vpack.c.bf16 %v443, %v442
    %v472 = vpack.c.bf16 %v445, %v444
    %v473 = vpack.c.bf16 %v447, %v446
    %v474 = vpack.c.bf16 %v449, %v448
    %v475 = vpack.c.bf16 %v451, %v450
    %s476 = scalar_lea.vmem [#allocation4], 64
    %v477 = vld [vmem:[%s476] sm:$0xf]
    %v478 = vld [vmem:[%s476 + $0x4] sm:$0xf]
    %v479 = vld [vmem:[%s476 + $0x8] sm:$0xf]
    %v480 = vld [vmem:[%s476 + $0xc] sm:$0xf]
    %v481 = vld [vmem:[%s476 + $0x10] sm:$0xf]
    %v482 = vld [vmem:[%s476 + $0x14] sm:$0xf]
    %v483 = vld [vmem:[%s476 + $0x18] sm:$0xf]
    %v484 = vld [vmem:[%s476 + $0x1c] sm:$0xf]
    %v485 = vld [vmem:[%s476 + $0x20] sm:$0xf]
    %v486 = vld [vmem:[%s476 + $0x24] sm:$0xf]
    %v487 = vld [vmem:[%s476 + $0x28] sm:$0xf]
    %v488 = vld [vmem:[%s476 + $0x2c] sm:$0xf]
    %v489 = vld [vmem:[%s476 + $0x30] sm:$0xf]
    %v490 = vld [vmem:[%s476 + $0x34] sm:$0xf]
    %v491 = vld [vmem:[%s476 + $0x38] sm:$0xf]
    %v492 = vld [vmem:[%s476 + $0x3c] sm:$0xf]
    %s493 = scalar_lea.vmem %s2, 1
    %v494 = vld [vmem:[%s493] sm:$0x1]
    %v496 = vlaneseq
    %v497 = vshrl.u32 %v496, 7
    %v498 = vsub.s32 0, %v497
    %v499 = vrot.slane %v494, %v498
    %v517 = vunpack.c.l.b16 %v477
    %v518 = vunpack.c.l.b16 %v478
    %v519 = vunpack.c.l.b16 %v479
    %v520 = vunpack.c.l.b16 %v480
    %v521 = vunpack.c.l.b16 %v481
    %v522 = vunpack.c.l.b16 %v482
    %v523 = vunpack.c.l.b16 %v483
    %v524 = vunpack.c.l.b16 %v484
    %v525 = vunpack.c.l.b16 %v485
    %v526 = vunpack.c.l.b16 %v486
    %v527 = vunpack.c.l.b16 %v487
    %v528 = vunpack.c.l.b16 %v488
    %v529 = vunpack.c.l.b16 %v489
    %v530 = vunpack.c.l.b16 %v490
    %v531 = vunpack.c.l.b16 %v491
    %v532 = vunpack.c.l.b16 %v492
    %v533 = vpack.c.b16 %v518, %v517
    %v534 = vpack.c.b16 %v520, %v519
    %v535 = vpack.c.b16 %v522, %v521
    %v536 = vpack.c.b16 %v524, %v523
    %v537 = vpack.c.b16 %v526, %v525
    %v538 = vpack.c.b16 %v528, %v527
    %v539 = vpack.c.b16 %v530, %v529
    %v540 = vpack.c.b16 %v532, %v531
    %549 = vmatprep.subr.bf16.mxu0 0
    %550 = vmatpush1.bf16.msra.mxu0 %v540
    %551 = vmatprep.subr.bf16.mxu0 0
    %552 = vmatpush1.bf16.msra.mxu0 %v539
    %553 = vmatprep.subr.bf16.mxu0 0
    %554 = vmatpush1.bf16.msra.mxu0 %v538
    %555 = vmatprep.subr.bf16.mxu0 0
    %556 = vmatpush1.bf16.msra.mxu0 %v537
    %557 = vmatprep.subr.bf16.mxu0 0
    %558 = vmatpush1.bf16.msra.mxu0 %v536
    %559 = vmatprep.subr.bf16.mxu0 0
    %560 = vmatpush1.bf16.msra.mxu0 %v535
    %561 = vmatprep.subr.bf16.mxu0 0
    %562 = vmatpush1.bf16.msra.mxu0 %v534
    %563 = vmatprep.subr.bf16.mxu0 0
    %564 = vmatpush1.bf16.msra.mxu0 %v533
    %565 = vmatprep.subr.bf16.mxu0 0
    %566 = vmatpush2.bf16.msra.mxu0 0
    %567 = vmatprep.subr.bf16.mxu0 0
    %568 = vmatpush2.bf16.msra.mxu0 0
    %569 = vmatprep.subr.bf16.mxu0 0
    %570 = vmatpush2.bf16.msra.mxu0 0
    %571 = vmatprep.subr.bf16.mxu0 0
    %572 = vmatpush2.bf16.msra.mxu0 0
    %573 = vmatprep.subr.bf16.mxu0 0
    %574 = vmatpush2.bf16.msra.mxu0 0
    %575 = vmatprep.subr.bf16.mxu0 0
    %576 = vmatpush2.bf16.msra.mxu0 0
    %577 = vmatprep.subr.bf16.mxu0 0
    %578 = vmatpush2.bf16.msra.mxu0 0
    %579 = vmatprep.subr.bf16.mxu0 0
    %580 = vmatpush2.bf16.msra.mxu0 0
    %581 = vmatprep.mubr.bf16.mxu0 0
    %582 = vmatmul.mubr.bf16.gmra.mxu0 %v468
    %v583 = vpop.f32.mrf.mxu0
    %v584 = vadd.f32 %v499, %v583
    %v585 = vpop.f32.mrf.mxu0
    %v586 = vpop.f32.mrf.mxu0
    %v587 = vadd.f32 %v499, %v586
    %v588 = vpop.f32.mrf.mxu0
    %589 = vmatprep.mubr.bf16.mxu0 0
    %590 = vmatmul.mubr.bf16.gmra.mxu0 %v469
    %v591 = vpop.f32.mrf.mxu0
    %v592 = vadd.f32 %v499, %v591
    %v593 = vpop.f32.mrf.mxu0
    %v594 = vpop.f32.mrf.mxu0
    %v595 = vadd.f32 %v499, %v594
    %v596 = vpop.f32.mrf.mxu0
    %597 = vmatprep.mubr.bf16.mxu0 0
    %598 = vmatmul.mubr.bf16.gmra.mxu0 %v470
    %v599 = vpop.f32.mrf.mxu0
    %v600 = vadd.f32 %v499, %v599
    %v601 = vpop.f32.mrf.mxu0
    %v602 = vpop.f32.mrf.mxu0
    %v603 = vadd.f32 %v499, %v602
    %v604 = vpop.f32.mrf.mxu0
    %605 = vmatprep.mubr.bf16.mxu0 0
    %606 = vmatmul.mubr.bf16.gmra.mxu0 %v471
    %v607 = vpop.f32.mrf.mxu0
    %v608 = vadd.f32 %v499, %v607
    %v609 = vpop.f32.mrf.mxu0
    %v610 = vpop.f32.mrf.mxu0
    %v611 = vadd.f32 %v499, %v610
    %v612 = vpop.f32.mrf.mxu0
    %613 = vmatprep.mubr.bf16.mxu0 0
    %614 = vmatmul.mubr.bf16.gmra.mxu0 %v472
    %v615 = vpop.f32.mrf.mxu0
    %v616 = vadd.f32 %v499, %v615
    %v617 = vpop.f32.mrf.mxu0
    %v618 = vpop.f32.mrf.mxu0
    %v619 = vadd.f32 %v499, %v618
    %v620 = vpop.f32.mrf.mxu0
    %621 = vmatprep.mubr.bf16.mxu0 0
    %622 = vmatmul.mubr.bf16.gmra.mxu0 %v473
    %v623 = vpop.f32.mrf.mxu0
    %v624 = vadd.f32 %v499, %v623
    %v625 = vpop.f32.mrf.mxu0
    %v626 = vpop.f32.mrf.mxu0
    %v627 = vadd.f32 %v499, %v626
    %v628 = vpop.f32.mrf.mxu0
    %629 = vmatprep.mubr.bf16.mxu0 0
    %630 = vmatmul.mubr.bf16.gmra.mxu0 %v474
    %v631 = vpop.f32.mrf.mxu0
    %v632 = vadd.f32 %v499, %v631
    %v633 = vpop.f32.mrf.mxu0
    %v634 = vpop.f32.mrf.mxu0
    %v635 = vadd.f32 %v499, %v634
    %v636 = vpop.f32.mrf.mxu0
    %637 = vmatprep.mubr.bf16.mxu0 0
    %638 = vmatmul.mubr.bf16.gmra.mxu0 %v475
    %v639 = vpop.f32.mrf.mxu0
    %v640 = vadd.f32 %v499, %v639
    %v641 = vpop.f32.mrf.mxu0
    %v642 = vpop.f32.mrf.mxu0
    %v643 = vadd.f32 %v499, %v642
    %v644 = vpop.f32.mrf.mxu0
    %645 = vdwg.mxu0
    %v646 = vpack.c.bf16 %v587, %v584
    %v647 = vpack.c.bf16 %v595, %v592
    %v648 = vpack.c.bf16 %v603, %v600
    %v649 = vpack.c.bf16 %v611, %v608
    %v650 = vpack.c.bf16 %v619, %v616
    %v651 = vpack.c.bf16 %v627, %v624
    %v652 = vpack.c.bf16 %v635, %v632
    %v653 = vpack.c.bf16 %v643, %v640
    %654 = vmatprep.subr.bf16.mxu0 0
    %655 = vmatpush1.bf16.msra.mxu0 %v653
    %656 = vmatprep.subr.bf16.mxu0 0
    %657 = vmatpush1.bf16.msra.mxu0 %v652
    %658 = vmatprep.subr.bf16.mxu0 0
    %659 = vmatpush1.bf16.msra.mxu0 %v651
    %660 = vmatprep.subr.bf16.mxu0 0
    %661 = vmatpush1.bf16.msra.mxu0 %v650
    %662 = vmatprep.subr.bf16.mxu0 0
    %663 = vmatpush1.bf16.msra.mxu0 %v649
    %664 = vmatprep.subr.bf16.mxu0 0
    %665 = vmatpush1.bf16.msra.mxu0 %v648
    %666 = vmatprep.subr.bf16.mxu0 0
    %667 = vmatpush1.bf16.msra.mxu0 %v647
    %668 = vmatprep.subr.bf16.mxu0 0
    %669 = vmatpush1.bf16.msra.mxu0 %v646
    %670 = vmatprep.subr.bf16.mxu0 0
    %671 = vmatpush2.bf16.msra.mxu0 0
    %672 = vmatprep.subr.bf16.mxu0 0
    %673 = vmatpush2.bf16.msra.mxu0 0
    %674 = vmatprep.subr.bf16.mxu0 0
    %675 = vmatpush2.bf16.msra.mxu0 0
    %676 = vmatprep.subr.bf16.mxu0 0
    %677 = vmatpush2.bf16.msra.mxu0 0
    %678 = vmatprep.subr.bf16.mxu0 0
    %679 = vmatpush2.bf16.msra.mxu0 0
    %680 = vmatprep.subr.bf16.mxu0 0
    %681 = vmatpush2.bf16.msra.mxu0 0
    %682 = vmatprep.subr.bf16.mxu0 0
    %683 = vmatpush2.bf16.msra.mxu0 0
    %684 = vmatprep.subr.bf16.mxu0 0
    %685 = vmatpush2.bf16.msra.mxu0 0
    %686 = vmatprep.mubr.bf16.mxu0 0
    %687 = vmatmul.mubr.bf16.gmra.mxu0 %v307
    %v688 = vpop.f32.mrf.mxu0
    %v689 = vadd.f32 0.0, %v688
    %v690 = vpop.f32.mrf.mxu0
    %v691 = vpop.f32.mrf.mxu0
    %v692 = vadd.f32 0.0, %v691
    %v693 = vpop.f32.mrf.mxu0
    %694 = vmatprep.mubr.bf16.mxu0 0
    %695 = vmatmul.mubr.bf16.gmra.mxu0 %v308
    %v696 = vpop.f32.mrf.mxu0
    %v697 = vadd.f32 0.0, %v696
    %v698 = vpop.f32.mrf.mxu0
    %v699 = vpop.f32.mrf.mxu0
    %v700 = vadd.f32 0.0, %v699
    %v701 = vpop.f32.mrf.mxu0
    %702 = vmatprep.mubr.bf16.mxu0 0
    %703 = vmatmul.mubr.bf16.gmra.mxu0 %v309
    %v704 = vpop.f32.mrf.mxu0
    %v705 = vadd.f32 0.0, %v704
    %v706 = vpop.f32.mrf.mxu0
    %v707 = vpop.f32.mrf.mxu0
    %v708 = vadd.f32 0.0, %v707
    %v709 = vpop.f32.mrf.mxu0
    %710 = vmatprep.mubr.bf16.mxu0 0
    %711 = vmatmul.mubr.bf16.gmra.mxu0 %v310
    %v712 = vpop.f32.mrf.mxu0
    %v713 = vadd.f32 0.0, %v712
    %v714 = vpop.f32.mrf.mxu0
    %v715 = vpop.f32.mrf.mxu0
    %v716 = vadd.f32 0.0, %v715
    %v717 = vpop.f32.mrf.mxu0
    %718 = vmatprep.mubr.bf16.mxu0 0
    %719 = vmatmul.mubr.bf16.gmra.mxu0 %v311
    %v720 = vpop.f32.mrf.mxu0
    %v721 = vadd.f32 0.0, %v720
    %v722 = vpop.f32.mrf.mxu0
    %v723 = vpop.f32.mrf.mxu0
    %v724 = vadd.f32 0.0, %v723
    %v725 = vpop.f32.mrf.mxu0
    %726 = vmatprep.mubr.bf16.mxu0 0
    %727 = vmatmul.mubr.bf16.gmra.mxu0 %v312
    %v728 = vpop.f32.mrf.mxu0
    %v729 = vadd.f32 0.0, %v728
    %v730 = vpop.f32.mrf.mxu0
    %v731 = vpop.f32.mrf.mxu0
    %v732 = vadd.f32 0.0, %v731
    %v733 = vpop.f32.mrf.mxu0
    %734 = vmatprep.mubr.bf16.mxu0 0
    %735 = vmatmul.mubr.bf16.gmra.mxu0 %v313
    %v736 = vpop.f32.mrf.mxu0
    %v737 = vadd.f32 0.0, %v736
    %v738 = vpop.f32.mrf.mxu0
    %v739 = vpop.f32.mrf.mxu0
    %v740 = vadd.f32 0.0, %v739
    %v741 = vpop.f32.mrf.mxu0
    %742 = vmatprep.mubr.bf16.mxu0 0
    %743 = vmatmul.mubr.bf16.gmra.mxu0 %v314
    %v744 = vpop.f32.mrf.mxu0
    %v745 = vadd.f32 0.0, %v744
    %v746 = vpop.f32.mrf.mxu0
    %v747 = vpop.f32.mrf.mxu0
    %v748 = vadd.f32 0.0, %v747
    %v749 = vpop.f32.mrf.mxu0
    %750 = vdwg.mxu0
    %v751 = vmul.f32 %v689, 0.5
    %v752 = vmul.f32 %v692, 0.5
    %v753 = vmul.f32 %v697, 0.5
    %v754 = vmul.f32 %v700, 0.5
    %v755 = vmul.f32 %v705, 0.5
    %v756 = vmul.f32 %v708, 0.5
    %v757 = vmul.f32 %v713, 0.5
    %v758 = vmul.f32 %v716, 0.5
    %v759 = vmul.f32 %v721, 0.5
    %v760 = vmul.f32 %v724, 0.5
    %v761 = vmul.f32 %v729, 0.5
    %v762 = vmul.f32 %v732, 0.5
    %v763 = vmul.f32 %v737, 0.5
    %v764 = vmul.f32 %v740, 0.5
    %v765 = vmul.f32 %v745, 0.5
    %v766 = vmul.f32 %v748, 0.5
    %v767 = vadd.f32 %v584, %v751
    %v768 = vadd.f32 %v587, %v752
    %v769 = vadd.f32 %v592, %v753
    %v770 = vadd.f32 %v595, %v754
    %v771 = vadd.f32 %v600, %v755
    %v772 = vadd.f32 %v603, %v756
    %v773 = vadd.f32 %v608, %v757
    %v774 = vadd.f32 %v611, %v758
    %v775 = vadd.f32 %v616, %v759
    %v776 = vadd.f32 %v619, %v760
    %v777 = vadd.f32 %v624, %v761
    %v778 = vadd.f32 %v627, %v762
    %v779 = vadd.f32 %v632, %v763
    %v780 = vadd.f32 %v635, %v764
    %v781 = vadd.f32 %v640, %v765
    %v782 = vadd.f32 %v643, %v766
    %v783 = vadd.f32 %v452, %v767
    %v784 = vadd.f32 %v453, %v768
    %v785 = vadd.f32 %v454, %v769
    %v786 = vadd.f32 %v455, %v770
    %v787 = vadd.f32 %v456, %v771
    %v788 = vadd.f32 %v457, %v772
    %v789 = vadd.f32 %v458, %v773
    %v790 = vadd.f32 %v459, %v774
    %v791 = vadd.f32 %v460, %v775
    %v792 = vadd.f32 %v461, %v776
    %v793 = vadd.f32 %v462, %v777
    %v794 = vadd.f32 %v463, %v778
    %v795 = vadd.f32 %v464, %v779
    %v796 = vadd.f32 %v465, %v780
    %v797 = vadd.f32 %v466, %v781
    %v798 = vadd.f32 %v467, %v782
    %799 = vst [vmem:[%s4] sm:$0xff] %v783
    %800 = vst [vmem:[%s4 + $0x8] sm:$0xff] %v784
    %801 = vst [vmem:[%s4 + $0x10] sm:$0xff] %v785
    %802 = vst [vmem:[%s4 + $0x18] sm:$0xff] %v786
    %803 = vst [vmem:[%s4 + $0x20] sm:$0xff] %v787
    %804 = vst [vmem:[%s4 + $0x28] sm:$0xff] %v788
    %805 = vst [vmem:[%s4 + $0x30] sm:$0xff] %v789
    %806 = vst [vmem:[%s4 + $0x38] sm:$0xff] %v790
    %807 = vst [vmem:[%s4 + $0x40] sm:$0xff] %v791
    %808 = vst [vmem:[%s4 + $0x48] sm:$0xff] %v792
    %809 = vst [vmem:[%s4 + $0x50] sm:$0xff] %v793
    %810 = vst [vmem:[%s4 + $0x58] sm:$0xff] %v794
    %811 = vst [vmem:[%s4 + $0x60] sm:$0xff] %v795
    %812 = vst [vmem:[%s4 + $0x68] sm:$0xff] %v796
    %813 = vst [vmem:[%s4 + $0x70] sm:$0xff] %v797
    %814 = vst [vmem:[%s4 + $0x78] sm:$0xff] %v798
    // Predicated region
    $region30: #{net_forward_prepped.1} parent=1 // pred_check
      _
    $region31: #{net_forward_prepped.1} parent=1 // pred_check_branch
      %816 = sbr.rel (0) target = $region33
    $region32: #{net_forward_prepped.1} parent=1 // pred_region
      _
    $region33: #{net_forward_prepped.1} parent=1 // pred_fallthru
      _
    // Predicated region
    $region34: #{net_forward_prepped.1} parent=1 // pred_check
      _
    $region35: #{net_forward_prepped.1} parent=1 // pred_check_branch
      %818 = sbr.rel (0) target = $region37
    $region36: #{net_forward_prepped.1} parent=1 // pred_region
      _
    $region37: #{net_forward_prepped.1} parent=1 // pred_fallthru
      _
    %819 = vsyncpa [#allocation3], 1
    %820 = vsyncpa [#allocation5], 1

</llo_original>
